<compile_context>
chip_gen: v6e
topology: v6e:2x2x1
jax: 0.10.0
libtpu: 0.0.40
codegen_flags: <defaults>
</compile_context>

<pallas_src>
import jax
import jax.numpy as jnp
from jax.experimental import pallas as pl
from jax.experimental.pallas import tpu as pltpu

block_size = 8
dropout_rate = 0.1   # eval mode -> identity
embedding_size = 3
head_size = 3
num_heads = 1        # torch.cat(dim=0) of a single head's output == the head output itself


def mha_kernel(x_ref, wqkv_ref, wp_ref, bp_ref, o_ref):
    x = x_ref[...].astype(jnp.float32)                      # (B, T, C)
    B, T, C = x.shape
    H = wp_ref.shape[0]                                     # head_size

    # Fused QKV projection: one contraction instead of three tiny MXU dots.
    qkv = jnp.einsum("btc,cd->btd", x, wqkv_ref[...],
                     preferred_element_type=jnp.float32)    # (B, T, 3H)
    q = qkv[..., 0:H]
    k = qkv[..., H:2 * H]
    v = qkv[..., 2 * H:3 * H]

    # Scaled dot-product scores; note the PyTorch code scales by C**-0.5
    # (embedding dim), not head_size**-0.5.  Contract last dims directly,
    # no explicit k transpose.
    scale = C ** (-0.5)
    s = jnp.einsum("bqd,bkd->bqk", q, k,
                   preferred_element_type=jnp.float32) * scale   # (B, T, T)

    # Causal mask built in-kernel; large finite negative instead of -inf
    # (robust even if a row were ever fully masked).
    row = jax.lax.broadcasted_iota(jnp.int32, (T, T), 0)
    col = jax.lax.broadcasted_iota(jnp.int32, (T, T), 1)
    s = jnp.where((row >= col)[None, :, :], s, -1e30)

    # Softmax along the key axis.
    s = s - jnp.max(s, axis=-1, keepdims=True)
    p = jnp.exp(s)
    p = p * pl.reciprocal(jnp.sum(p, axis=-1, keepdims=True))   # exact reciprocal

    # TODO(synk): nn.Dropout on attention weights / projected output is identity in eval mode.

    attn = jnp.einsum("bqk,bkd->bqd", p, v,
                      preferred_element_type=jnp.float32)        # (B, T, H)

    # Output projection (Linear with bias).
    y = jnp.einsum("bth,hc->btc", attn, wp_ref[...],
                   preferred_element_type=jnp.float32)
    y = y + bp_ref[...]                                          # (1, C) broadcasts

    o_ref[...] = y.astype(o_ref.dtype)


def multi_head_attention(x, wqkv, wp_t, bp):
    """x: (B,T,C); wqkv: (C,3H) = [Wq^T | Wk^T | Wv^T]; wp_t: (H,C); bp: (1,C)."""
    B, T, C = x.shape
    vmem = pltpu.MemorySpace.VMEM
    return pl.pallas_call(
        mha_kernel,
        out_shape=jax.ShapeDtypeStruct((B, T, C), x.dtype),
        in_specs=[
            pl.BlockSpec(memory_space=vmem),   # x
            pl.BlockSpec(memory_space=vmem),   # fused Wqkv^T
            pl.BlockSpec(memory_space=vmem),   # Wproj^T
            pl.BlockSpec(memory_space=vmem),   # bproj
        ],
        out_specs=pl.BlockSpec(memory_space=vmem),
    )(x, wqkv, wp_t, bp)


def _reference(x, wq_t, wk_t, wv_t, wp_t, bp):
    # Pure-JAX reference of the PyTorch forward (eval mode, num_heads=1).
    T = x.shape[1]
    q = x @ wq_t
    k = x @ wk_t
    v = x @ wv_t
    s = (q @ jnp.swapaxes(k, -2, -1)) * (x.shape[-1] ** -0.5)
    mask = jnp.tril(jnp.ones((T, T), dtype=jnp.float32))
    s = jnp.where(mask[None] == 0.0, -jnp.inf, s)
    p = jax.nn.softmax(s, axis=-1)
    head_out = p @ v
    return head_out @ wp_t + bp[0]


if __name__ == "__main__":
    B, T, C, H = 2, block_size, embedding_size, head_size

    key = jax.random.PRNGKey(0)
    k_x, k_q, k_k, k_v, k_p, k_b = jax.random.split(key, 6)

    x = jax.random.normal(k_x, (B, T, C), dtype=jnp.float32)

    # Deterministic synthetic parameters (PyTorch Linear weight is (out, in);
    # we store the transpose so the kernel does x @ W).
    wq_t = jax.random.normal(k_q, (C, H), dtype=jnp.float32) * 0.2
    wk_t = jax.random.normal(k_k, (C, H), dtype=jnp.float32) * 0.2
    wv_t = jax.random.normal(k_v, (C, H), dtype=jnp.float32) * 0.2
    wp_t = jax.random.normal(k_p, (H, C), dtype=jnp.float32) * 0.2
    bp = jax.random.normal(k_b, (1, C), dtype=jnp.float32) * 0.1

    # Fuse the three projection weights into one (C, 3H) matrix in the wrapper.
    wqkv = jnp.concatenate([wq_t, wk_t, wv_t], axis=1)

    out = multi_head_attention(x, wqkv, wp_t, bp)
    out = jax.block_until_ready(out)

    ref = _reference(x, wq_t, wk_t, wv_t, wp_t, bp)
    assert out.shape == (B, T, C)
    assert jnp.allclose(out, ref, atol=1e-5, rtol=1e-5), "mismatch vs reference"

    print("KERNEL_OK")
</pallas_src>

<mosaic_0001>
module attributes {stable_mosaic.version = 11 : i64} {
  func.func @mha_kernel(%arg0: memref<2x8x3xf32, #tpu.memory_space<vmem>>, %arg1: memref<3x9xf32, #tpu.memory_space<vmem>>, %arg2: memref<3x3xf32, #tpu.memory_space<vmem>>, %arg3: memref<1x3xf32, #tpu.memory_space<vmem>>, %arg4: memref<2x8x3xf32, #tpu.memory_space<vmem>>) attributes {dimension_semantics = [], scalar_prefetch = 0 : i64, scratch_operands = 0 : i64, tpu.core_type = #tpu.core_type<tc>} {
    %c0 = arith.constant 0 : index
    %c0_0 = arith.constant 0 : index
    %c0_1 = arith.constant 0 : index
    %0 = vector.load %arg0[%c0, %c0_0, %c0_1] : memref<2x8x3xf32, #tpu.memory_space<vmem>>, vector<2x8x3xf32>
    %c0_2 = arith.constant 0 : index
    %c0_3 = arith.constant 0 : index
    %1 = vector.load %arg1[%c0_2, %c0_3] : memref<3x9xf32, #tpu.memory_space<vmem>>, vector<3x9xf32>
    "tpu.trace_start"() <{level = 10 : i32, message = "btc,cd->btd"}> : () -> ()
    %cst = arith.constant dense<0.000000e+00> : vector<2x8x9xf32>
    %2 = tpu.matmul %0, %1, %cst {dimension_numbers = #tpu.dot_dimension_numbers<[2], [0], [0, 1], [1], [0, 0, 0, 1, 1, 1], [], []>} : vector<2x8x3xf32>, vector<3x9xf32>, vector<2x8x9xf32> -> vector<2x8x9xf32>
    "tpu.trace_stop"() : () -> ()
    %3 = vector.extract_strided_slice %2 {offsets = [0, 0, 0], sizes = [2, 8, 3], strides = [1, 1, 1]} : vector<2x8x9xf32> to vector<2x8x3xf32>
    %4 = vector.extract_strided_slice %2 {offsets = [0, 0, 3], sizes = [2, 8, 3], strides = [1, 1, 1]} : vector<2x8x9xf32> to vector<2x8x3xf32>
    %5 = vector.extract_strided_slice %2 {offsets = [0, 0, 6], sizes = [2, 8, 3], strides = [1, 1, 1]} : vector<2x8x9xf32> to vector<2x8x3xf32>
    "tpu.trace_start"() <{level = 10 : i32, message = "bqd,bkd->bqk"}> : () -> ()
    %cst_4 = arith.constant dense<0.000000e+00> : vector<2x8x8xf32>
    %6 = tpu.matmul %3, %4, %cst_4 {dimension_numbers = #tpu.dot_dimension_numbers<[2], [2], [1], [1], [0, 0, 0, 1, 1, 1], [0], [0]>} : vector<2x8x3xf32>, vector<2x8x3xf32>, vector<2x8x8xf32> -> vector<2x8x8xf32>
    "tpu.trace_stop"() : () -> ()
    %cst_5 = arith.constant 0.577350259 : f32
    %7 = vector.broadcast %cst_5 : f32 to vector<2x8x8xf32>
    %8 = arith.mulf %6, %7 : vector<2x8x8xf32>
    %9 = tpu.iota {dimensions = array<i32: 0>} : vector<8x8xi32>
    %10 = tpu.iota {dimensions = array<i32: 1>} : vector<8x8xi32>
    %11 = arith.cmpi sge, %9, %10 : vector<8x8xi32>
    %12 = vector.shape_cast %11 : vector<8x8xi1> to vector<1x8x8xi1>
    %cst_6 = arith.constant -1.000000e+30 : f32
    %13 = vector.shape_cast %12 : vector<1x8x8xi1> to vector<1x8x8xi1>
    %14 = vector.broadcast %13 : vector<1x8x8xi1> to vector<2x8x8xi1>
    %15 = vector.broadcast %cst_6 : f32 to vector<2x8x8xf32>
    %16 = arith.select %14, %8, %15 : vector<2x8x8xi1>, vector<2x8x8xf32>
    %cst_7 = arith.constant dense<0xFF800000> : vector<2x8xf32>
    %17 = vector.multi_reduction <maximumf>, %16, %cst_7 [2] : vector<2x8x8xf32> to vector<2x8xf32>
    %18 = vector.shape_cast %17 : vector<2x8xf32> to vector<2x8x1xf32>
    %19 = vector.broadcast %18 : vector<2x8x1xf32> to vector<2x8x8xf32>
    %20 = arith.subf %16, %19 : vector<2x8x8xf32>
    %21 = math.exp %20 : vector<2x8x8xf32>
    %cst_8 = arith.constant dense<0.000000e+00> : vector<2x8xf32>
    %22 = vector.multi_reduction <add>, %21, %cst_8 [2] : vector<2x8x8xf32> to vector<2x8xf32>
    %23 = vector.shape_cast %22 : vector<2x8xf32> to vector<2x8x1xf32>
    %24 = tpu.reciprocal %23 : vector<2x8x1xf32> -> vector<2x8x1xf32>
    %25 = vector.broadcast %24 : vector<2x8x1xf32> to vector<2x8x8xf32>
    %26 = arith.mulf %21, %25 : vector<2x8x8xf32>
    "tpu.trace_start"() <{level = 10 : i32, message = "bqk,bkd->bqd"}> : () -> ()
    %cst_9 = arith.constant dense<0.000000e+00> : vector<2x8x3xf32>
    %27 = tpu.matmul %26, %5, %cst_9 {dimension_numbers = #tpu.dot_dimension_numbers<[2], [1], [1], [2], [0, 0, 0, 1, 1, 2], [0], [0]>} : vector<2x8x8xf32>, vector<2x8x3xf32>, vector<2x8x3xf32> -> vector<2x8x3xf32>
    "tpu.trace_stop"() : () -> ()
    %c0_10 = arith.constant 0 : index
    %c0_11 = arith.constant 0 : index
    %28 = vector.load %arg2[%c0_10, %c0_11] : memref<3x3xf32, #tpu.memory_space<vmem>>, vector<3x3xf32>
    "tpu.trace_start"() <{level = 10 : i32, message = "bth,hc->btc"}> : () -> ()
    %cst_12 = arith.constant dense<0.000000e+00> : vector<2x8x3xf32>
    %29 = tpu.matmul %27, %28, %cst_12 {dimension_numbers = #tpu.dot_dimension_numbers<[2], [0], [0, 1], [1], [0, 0, 0, 1, 1, 1], [], []>} : vector<2x8x3xf32>, vector<3x3xf32>, vector<2x8x3xf32> -> vector<2x8x3xf32>
    "tpu.trace_stop"() : () -> ()
    %c0_13 = arith.constant 0 : index
    %c0_14 = arith.constant 0 : index
    %30 = vector.load %arg3[%c0_13, %c0_14] : memref<1x3xf32, #tpu.memory_space<vmem>>, vector<1x3xf32>
    %31 = vector.shape_cast %30 : vector<1x3xf32> to vector<1x1x3xf32>
    %32 = vector.broadcast %31 : vector<1x1x3xf32> to vector<2x8x3xf32>
    %33 = arith.addf %29, %32 : vector<2x8x3xf32>
    %c0_15 = arith.constant 0 : index
    %c0_16 = arith.constant 0 : index
    %c0_17 = arith.constant 0 : index
    %34 = vector.load %arg4[%c0_15, %c0_16, %c0_17] : memref<2x8x3xf32, #tpu.memory_space<vmem>>, vector<2x8x3xf32>
    tpu.vector_store %arg4[%c0_15, %c0_16, %c0_17], %33 {strides = array<i32>} : memref<2x8x3xf32, #tpu.memory_space<vmem>>, vector<2x8x3xf32>,
    return
  }
}

</mosaic_0001>

<llo_original>
// kernel: tpu_custom_call.1
$region0: #{tpu_custom_call.1}
  #allocation0 [shape = 'u32[]', space=smem, size = 0x4, offset = 0x4, fixed_abs, tag = 'smem constant byte address 0x4 - core index']
  #allocation1 [shape = 'u32[144,128]{1,0:T(1,128)}', space=vmem, size = 0x12000, scoped, tag = 'internal scratch']
  %s0 = inlined_call_operand.vmem [shape: f32[2,8,3], index: 0, kind: input, shape index: {}]
  %s1 = inlined_call_operand.vmem [shape: f32[3,9], index: 1, kind: input, shape index: {}]
  %s2 = inlined_call_operand.vmem [shape: f32[3,3], index: 2, kind: input, shape index: {}]
  %s3 = inlined_call_operand.vmem [shape: f32[1,3], index: 3, kind: input, shape index: {}]
  %s4 = inlined_call_operand.vmem [shape: f32[2,8,3], index: 4, kind: output, shape index: {}]
  %s5 = sld [smem:[#allocation0]]
  $region26: #{tpu_custom_call.1} parent=0
    _
  %s7 = ssub.s32 1, %s5
  %s8 = scalar_select 0, %s7, %s5
  // Predicated region
  $region2: #{tpu_custom_call.1} parent=0 // pred_check
    _
  $region3: #{tpu_custom_call.1} parent=0 // pred_check_branch
    %10 = sbr.rel (0) target = $region5
  $region4: #{tpu_custom_call.1} parent=0 // pred_region
    _
  $region5: #{tpu_custom_call.1} parent=0 // pred_fallthru
    _
  // Predicated region
  $region6: #{tpu_custom_call.1} parent=0 // pred_check
    _
  $region7: #{tpu_custom_call.1} parent=0 // pred_check_branch
    %12 = sbr.rel (0) target = $region9
  $region8: #{tpu_custom_call.1} parent=0 // pred_region
    _
  $region9: #{tpu_custom_call.1} parent=0 // pred_fallthru
    _
  // Predicated region
  $region10: #{tpu_custom_call.1} parent=0 // pred_check
    _
  $region11: #{tpu_custom_call.1} parent=0 // pred_check_branch
    %14 = sbr.rel (0) target = $region13
  $region12: #{tpu_custom_call.1} parent=0 // pred_region
    _
  $region13: #{tpu_custom_call.1} parent=0 // pred_fallthru
    _
  // Predicated region
  $region14: #{tpu_custom_call.1} parent=0 // pred_check
    _
  $region15: #{tpu_custom_call.1} parent=0 // pred_check_branch
    %16 = sbr.rel (0) target = $region17
  $region16: #{tpu_custom_call.1} parent=0 // pred_region
    _
  $region17: #{tpu_custom_call.1} parent=0 // pred_fallthru
    _
  %v17 = vld [vmem:[%s0] sm:$0xff]
  %v18 = vld [vmem:[%s0 + $0x8] sm:$0xff]
  %v19 = vld [vmem:[%s1] sm:$0x7]
  %vm20 = vcmask 23552
  %v22 = vsel %vm20, %v17, 0
  %v25 = vsel %vm20, %v18, 0
  %vm27 = vcmask 1042432
  %v29 = vsel %vm27, %v19, 0
  %31 = vmatprep.subr.mxu0 0.0
  %32 = vmatpush1.msra.mxu0 0.0
  %33 = vmatprep.subr.mxu0 0.0
  %34 = vmatpush1.msra.mxu0 0.0
  %35 = vmatprep.subr.mxu0 0.0
  %36 = vmatpush1.msra.mxu0 0.0
  %37 = vmatprep.subr.mxu0 0.0
  %38 = vmatpush1.msra.mxu0 0.0
  %39 = vmatprep.subr.mxu0 0.0
  %40 = vmatpush1.msra.mxu0 0.0
  %41 = vmatprep.subr.mxu0 0.0
  %42 = vmatpush1.msra.mxu0 0.0
  %43 = vmatprep.subr.mxu0 0.0
  %44 = vmatpush1.msra.mxu0 0.0
  %45 = vmatprep.subr.mxu0 0.0
  %46 = vmatpush1.msra.mxu0 0.0
  %47 = vmatprep.subr.mxu0 0.0
  %48 = vmatpush1.msra.mxu0 0.0
  %49 = vmatprep.subr.mxu0 0.0
  %50 = vmatpush1.msra.mxu0 0.0
  %51 = vmatprep.subr.mxu0 0.0
  %52 = vmatpush1.msra.mxu0 0.0
  %53 = vmatprep.subr.mxu0 0.0
  %54 = vmatpush1.msra.mxu0 0.0
  %55 = vmatprep.subr.mxu0 0.0
  %56 = vmatpush1.msra.mxu0 0.0
  %57 = vmatprep.subr.mxu0 0.0
  %58 = vmatpush1.msra.mxu0 0.0
  %59 = vmatprep.subr.mxu0 0.0
  %60 = vmatpush1.msra.mxu0 0.0
  %61 = vmatprep.subr.mxu0 0.0
  %62 = vmatpush1.msra.mxu0 %v29
  %63 = vmatprep.subr.mxu0 0.0
  %64 = vmatpush2.msra.mxu0 0.0
  %65 = vmatprep.subr.mxu0 0.0
  %66 = vmatpush2.msra.mxu0 0.0
  %67 = vmatprep.subr.mxu0 0.0
  %68 = vmatpush2.msra.mxu0 0.0
  %69 = vmatprep.subr.mxu0 0.0
  %70 = vmatpush2.msra.mxu0 0.0
  %71 = vmatprep.subr.mxu0 0.0
  %72 = vmatpush2.msra.mxu0 0.0
  %73 = vmatprep.subr.mxu0 0.0
  %74 = vmatpush2.msra.mxu0 0.0
  %75 = vmatprep.subr.mxu0 0.0
  %76 = vmatpush2.msra.mxu0 0.0
  %77 = vmatprep.subr.mxu0 0.0
  %78 = vmatpush2.msra.mxu0 0.0
  %79 = vmatprep.subr.mxu0 0.0
  %80 = vmatpush2.msra.mxu0 0.0
  %81 = vmatprep.subr.mxu0 0.0
  %82 = vmatpush2.msra.mxu0 0.0
  %83 = vmatprep.subr.mxu0 0.0
  %84 = vmatpush2.msra.mxu0 0.0
  %85 = vmatprep.subr.mxu0 0.0
  %86 = vmatpush2.msra.mxu0 0.0
  %87 = vmatprep.subr.mxu0 0.0
  %88 = vmatpush2.msra.mxu0 0.0
  %89 = vmatprep.subr.mxu0 0.0
  %90 = vmatpush2.msra.mxu0 0.0
  %91 = vmatprep.subr.mxu0 0.0
  %92 = vmatpush2.msra.mxu0 0.0
  %93 = vmatprep.subr.mxu0 0.0
  %94 = vmatpush2.msra.mxu0 0.0
  %95 = vmatprep.mubr.f32.mxu0 0.0
  %96 = vmatmul.mubr.f32.gmra.mxu0 %v22
  %v97 = vpop.f32.mrf.mxu0
  %v98 = vadd.f32 0.0, %v97
  %v99 = vpop.f32.mrf.mxu0
  %100 = vmatprep.mubr.f32.mxu0 0.0
  %101 = vmatmul.mubr.f32.gmra.mxu0 %v25
  %v102 = vpop.f32.mrf.mxu0
  %v103 = vadd.f32 0.0, %v102
  %v104 = vpop.f32.mrf.mxu0
  %105 = vdwg.mxu0
  %107 = vrot.lane.b32.xlu0 %v98, 125
  %v108 = vpop.permute.xlu0 %107
  %v109 = vsel %vm20, %v98, 0
  %v111 = vsel %vm20, %v108, 0
  %113 = vmatprep.subr.mxu0 0.0
  %114 = vmatpush1.xpose.msra.mxu0 0.0
  %115 = vmatprep.subr.mxu0 0.0
  %116 = vmatpush1.xpose.msra.mxu0 0.0
  %117 = vmatprep.subr.mxu0 0.0
  %118 = vmatpush1.xpose.msra.mxu0 0.0
  %119 = vmatprep.subr.mxu0 0.0
  %120 = vmatpush1.xpose.msra.mxu0 0.0
  %121 = vmatprep.subr.mxu0 0.0
  %122 = vmatpush1.xpose.msra.mxu0 0.0
  %123 = vmatprep.subr.mxu0 0.0
  %124 = vmatpush1.xpose.msra.mxu0 0.0
  %125 = vmatprep.subr.mxu0 0.0
  %126 = vmatpush1.xpose.msra.mxu0 0.0
  %127 = vmatprep.subr.mxu0 0.0
  %128 = vmatpush1.xpose.msra.mxu0 0.0
  %129 = vmatprep.subr.mxu0 0.0
  %130 = vmatpush1.xpose.msra.mxu0 0.0
  %131 = vmatprep.subr.mxu0 0.0
  %132 = vmatpush1.xpose.msra.mxu0 0.0
  %133 = vmatprep.subr.mxu0 0.0
  %134 = vmatpush1.xpose.msra.mxu0 0.0
  %135 = vmatprep.subr.mxu0 0.0
  %136 = vmatpush1.xpose.msra.mxu0 0.0
  %137 = vmatprep.subr.mxu0 0.0
  %138 = vmatpush1.xpose.msra.mxu0 0.0
  %139 = vmatprep.subr.mxu0 0.0
  %140 = vmatpush1.xpose.msra.mxu0 0.0
  %141 = vmatprep.subr.mxu0 0.0
  %142 = vmatpush1.xpose.msra.mxu0 0.0
  %143 = vmatprep.subr.mxu0 0.0
  %144 = vmatpush1.xpose.msra.mxu0 %v111
  %145 = vmatprep.subr.mxu0 0.0
  %146 = vmatpush2.xpose.msra.mxu0 0.0
  %147 = vmatprep.subr.mxu0 0.0
  %148 = vmatpush2.xpose.msra.mxu0 0.0
  %149 = vmatprep.subr.mxu0 0.0
  %150 = vmatpush2.xpose.msra.mxu0 0.0
  %151 = vmatprep.subr.mxu0 0.0
  %152 = vmatpush2.xpose.msra.mxu0 0.0
  %153 = vmatprep.subr.mxu0 0.0
  %154 = vmatpush2.xpose.msra.mxu0 0.0
  %155 = vmatprep.subr.mxu0 0.0
  %156 = vmatpush2.xpose.msra.mxu0 0.0
  %157 = vmatprep.subr.mxu0 0.0
  %158 = vmatpush2.xpose.msra.mxu0 0.0
  %159 = vmatprep.subr.mxu0 0.0
  %160 = vmatpush2.xpose.msra.mxu0 0.0
  %161 = vmatprep.subr.mxu0 0.0
  %162 = vmatpush2.xpose.msra.mxu0 0.0
  %163 = vmatprep.subr.mxu0 0.0
  %164 = vmatpush2.xpose.msra.mxu0 0.0
  %165 = vmatprep.subr.mxu0 0.0
  %166 = vmatpush2.xpose.msra.mxu0 0.0
  %167 = vmatprep.subr.mxu0 0.0
  %168 = vmatpush2.xpose.msra.mxu0 0.0
  %169 = vmatprep.subr.mxu0 0.0
  %170 = vmatpush2.xpose.msra.mxu0 0.0
  %171 = vmatprep.subr.mxu0 0.0
  %172 = vmatpush2.xpose.msra.mxu0 0.0
  %173 = vmatprep.subr.mxu0 0.0
  %174 = vmatpush2.xpose.msra.mxu0 0.0
  %175 = vmatprep.subr.mxu0 0.0
  %176 = vmatpush2.xpose.msra.mxu0 0.0
  %177 = vmatprep.mubr.f32.mxu0 0.0
  %178 = vmatmul.mubr.f32.gmra.mxu0 %v109
  %v179 = vpop.f32.mrf.mxu0
  %v180 = vadd.f32 0.0, %v179
  %v181 = vpop.f32.mrf.mxu0
  %182 = vdwg.mxu0
  %184 = vrot.lane.b32.xlu0 %v103, 125
  %v185 = vpop.permute.xlu0 %184
  %v186 = vsel %vm20, %v103, 0
  %v188 = vsel %vm20, %v185, 0
  %190 = vmatprep.subr.mxu0 0.0
  %191 = vmatpush1.xpose.msra.mxu0 0.0
  %192 = vmatprep.subr.mxu0 0.0
  %193 = vmatpush1.xpose.msra.mxu0 0.0
  %194 = vmatprep.subr.mxu0 0.0
  %195 = vmatpush1.xpose.msra.mxu0 0.0
  %196 = vmatprep.subr.mxu0 0.0
  %197 = vmatpush1.xpose.msra.mxu0 0.0
  %198 = vmatprep.subr.mxu0 0.0
  %199 = vmatpush1.xpose.msra.mxu0 0.0
  %200 = vmatprep.subr.mxu0 0.0
  %201 = vmatpush1.xpose.msra.mxu0 0.0
  %202 = vmatprep.subr.mxu0 0.0
  %203 = vmatpush1.xpose.msra.mxu0 0.0
  %204 = vmatprep.subr.mxu0 0.0
  %205 = vmatpush1.xpose.msra.mxu0 0.0
  %206 = vmatprep.subr.mxu0 0.0
  %207 = vmatpush1.xpose.msra.mxu0 0.0
  %208 = vmatprep.subr.mxu0 0.0
  %209 = vmatpush1.xpose.msra.mxu0 0.0
  %210 = vmatprep.subr.mxu0 0.0
  %211 = vmatpush1.xpose.msra.mxu0 0.0
  %212 = vmatprep.subr.mxu0 0.0
  %213 = vmatpush1.xpose.msra.mxu0 0.0
  %214 = vmatprep.subr.mxu0 0.0
  %215 = vmatpush1.xpose.msra.mxu0 0.0
  %216 = vmatprep.subr.mxu0 0.0
  %217 = vmatpush1.xpose.msra.mxu0 0.0
  %218 = vmatprep.subr.mxu0 0.0
  %219 = vmatpush1.xpose.msra.mxu0 0.0
  %220 = vmatprep.subr.mxu0 0.0
  %221 = vmatpush1.xpose.msra.mxu0 %v188
  %222 = vmatprep.subr.mxu0 0.0
  %223 = vmatpush2.xpose.msra.mxu0 0.0
  %224 = vmatprep.subr.mxu0 0.0
  %225 = vmatpush2.xpose.msra.mxu0 0.0
  %226 = vmatprep.subr.mxu0 0.0
  %227 = vmatpush2.xpose.msra.mxu0 0.0
  %228 = vmatprep.subr.mxu0 0.0
  %229 = vmatpush2.xpose.msra.mxu0 0.0
  %230 = vmatprep.subr.mxu0 0.0
  %231 = vmatpush2.xpose.msra.mxu0 0.0
  %232 = vmatprep.subr.mxu0 0.0
  %233 = vmatpush2.xpose.msra.mxu0 0.0
  %234 = vmatprep.subr.mxu0 0.0
  %235 = vmatpush2.xpose.msra.mxu0 0.0
  %236 = vmatprep.subr.mxu0 0.0
  %237 = vmatpush2.xpose.msra.mxu0 0.0
  %238 = vmatprep.subr.mxu0 0.0
  %239 = vmatpush2.xpose.msra.mxu0 0.0
  %240 = vmatprep.subr.mxu0 0.0
  %241 = vmatpush2.xpose.msra.mxu0 0.0
  %242 = vmatprep.subr.mxu0 0.0
  %243 = vmatpush2.xpose.msra.mxu0 0.0
  %244 = vmatprep.subr.mxu0 0.0
  %245 = vmatpush2.xpose.msra.mxu0 0.0
  %246 = vmatprep.subr.mxu0 0.0
  %247 = vmatpush2.xpose.msra.mxu0 0.0
  %248 = vmatprep.subr.mxu0 0.0
  %249 = vmatpush2.xpose.msra.mxu0 0.0
  %250 = vmatprep.subr.mxu0 0.0
  %251 = vmatpush2.xpose.msra.mxu0 0.0
  %252 = vmatprep.subr.mxu0 0.0
  %253 = vmatpush2.xpose.msra.mxu0 0.0
  %254 = vmatprep.mubr.f32.mxu0 0.0
  %255 = vmatmul.mubr.f32.gmra.mxu0 %v186
  %v256 = vpop.f32.mrf.mxu0
  %v257 = vadd.f32 0.0, %v256
  %v258 = vpop.f32.mrf.mxu0
  %259 = vdwg.mxu0
  %v260 = vmul.f32 %v180, 0.57735026
  %v261 = vmul.f32 %v257, 0.57735026
  %v262 = vlaneseq
  %v263 = vshrl.u32 %v262, 7
  %v264 = vlaneseq
  %v265 = vand.u32 %v264, 127
  %vm266 = vcmp.ge.s32.totalorder %v263, %v265
  %v267 = vsel %vm266, 1, 0
  %vm268 = vcmp.eq.s32.totalorder %v267, 1
  %v269 = vsel %vm268, %v260, -1e+30
  %v270 = vsel %vm268, %v261, -1e+30
  %vm271 = vcmask 64512
  %v272 = vsel %vm271, %v269, -inf
  %273 = vmax.xlane.f32.xlu0 %v272
  %v274 = vpop.xlane.xlu0 %273
  %v275 = vsel %vm271, %v270, -inf
  %276 = vmax.xlane.f32.xlu0 %v275
  %v277 = vpop.xlane.xlu0 %276
  %v278 = vsub.f32 %v269, %v274
  %v279 = vsub.f32 %v270, %v277
  %v280 = vmul.f32 %v278, 1.442695
  %v281 = vpow.pop %v280
  %v282 = vmul.f32 %v279, 1.442695
  %v283 = vpow.pop %v282
  %v284 = vsel %vm271, %v281, 0.0
  %285 = vadd.xlane.f32.xlu0 %v284
  %v286 = vpop.xlane.xlu0 %285
  %v287 = vsel %vm271, %v283, 0.0
  %288 = vadd.xlane.f32.xlu0 %v287
  %v289 = vpop.xlane.xlu0 %288
  %v290 = vrcp.pop %v286
  %v291 = vrcp.pop %v289
  %v292 = vmul.f32 %v281, %v290
  %v293 = vmul.f32 %v283, %v291
  %294 = vrot.lane.b32.xlu0 %v98, 122
  %v295 = vpop.permute.xlu0 %294
  %v298 = vsel %vm271, %v292, 0
  %300 = vmatprep.subr.mxu0 0.0
  %301 = vmatpush1.msra.mxu0 0.0
  %302 = vmatprep.subr.mxu0 0.0
  %303 = vmatpush1.msra.mxu0 0.0
  %304 = vmatprep.subr.mxu0 0.0
  %305 = vmatpush1.msra.mxu0 0.0
  %306 = vmatprep.subr.mxu0 0.0
  %307 = vmatpush1.msra.mxu0 0.0
  %308 = vmatprep.subr.mxu0 0.0
  %309 = vmatpush1.msra.mxu0 0.0
  %310 = vmatprep.subr.mxu0 0.0
  %311 = vmatpush1.msra.mxu0 0.0
  %312 = vmatprep.subr.mxu0 0.0
  %313 = vmatpush1.msra.mxu0 0.0
  %314 = vmatprep.subr.mxu0 0.0
  %315 = vmatpush1.msra.mxu0 0.0
  %316 = vmatprep.subr.mxu0 0.0
  %317 = vmatpush1.msra.mxu0 0.0
  %318 = vmatprep.subr.mxu0 0.0
  %319 = vmatpush1.msra.mxu0 0.0
  %320 = vmatprep.subr.mxu0 0.0
  %321 = vmatpush1.msra.mxu0 0.0
  %322 = vmatprep.subr.mxu0 0.0
  %323 = vmatpush1.msra.mxu0 0.0
  %324 = vmatprep.subr.mxu0 0.0
  %325 = vmatpush1.msra.mxu0 0.0
  %326 = vmatprep.subr.mxu0 0.0
  %327 = vmatpush1.msra.mxu0 0.0
  %328 = vmatprep.subr.mxu0 0.0
  %329 = vmatpush1.msra.mxu0 0.0
  %330 = vmatprep.subr.mxu0 0.0
  %331 = vmatpush1.msra.mxu0 %v295
  %332 = vmatprep.subr.mxu0 0.0
  %333 = vmatpush2.msra.mxu0 0.0
  %334 = vmatprep.subr.mxu0 0.0
  %335 = vmatpush2.msra.mxu0 0.0
  %336 = vmatprep.subr.mxu0 0.0
  %337 = vmatpush2.msra.mxu0 0.0
  %338 = vmatprep.subr.mxu0 0.0
  %339 = vmatpush2.msra.mxu0 0.0
  %340 = vmatprep.subr.mxu0 0.0
  %341 = vmatpush2.msra.mxu0 0.0
  %342 = vmatprep.subr.mxu0 0.0
  %343 = vmatpush2.msra.mxu0 0.0
  %344 = vmatprep.subr.mxu0 0.0
  %345 = vmatpush2.msra.mxu0 0.0
  %346 = vmatprep.subr.mxu0 0.0
  %347 = vmatpush2.msra.mxu0 0.0
  %348 = vmatprep.subr.mxu0 0.0
  %349 = vmatpush2.msra.mxu0 0.0
  %350 = vmatprep.subr.mxu0 0.0
  %351 = vmatpush2.msra.mxu0 0.0
  %352 = vmatprep.subr.mxu0 0.0
  %353 = vmatpush2.msra.mxu0 0.0
  %354 = vmatprep.subr.mxu0 0.0
  %355 = vmatpush2.msra.mxu0 0.0
  %356 = vmatprep.subr.mxu0 0.0
  %357 = vmatpush2.msra.mxu0 0.0
  %358 = vmatprep.subr.mxu0 0.0
  %359 = vmatpush2.msra.mxu0 0.0
  %360 = vmatprep.subr.mxu0 0.0
  %361 = vmatpush2.msra.mxu0 0.0
  %362 = vmatprep.subr.mxu0 0.0
  %363 = vmatpush2.msra.mxu0 0.0
  %364 = vmatprep.mubr.f32.mxu0 0.0
  %365 = vmatmul.mubr.f32.gmra.mxu0 %v298
  %v366 = vpop.f32.mrf.mxu0
  %v367 = vadd.f32 0.0, %v366
  %v368 = vpop.f32.mrf.mxu0
  %369 = vdwg.mxu0
  %370 = vrot.lane.b32.xlu0 %v103, 122
  %v371 = vpop.permute.xlu0 %370
  %v374 = vsel %vm271, %v293, 0
  %376 = vmatprep.subr.mxu0 0.0
  %377 = vmatpush1.msra.mxu0 0.0
  %378 = vmatprep.subr.mxu0 0.0
  %379 = vmatpush1.msra.mxu0 0.0
  %380 = vmatprep.subr.mxu0 0.0
  %381 = vmatpush1.msra.mxu0 0.0
  %382 = vmatprep.subr.mxu0 0.0
  %383 = vmatpush1.msra.mxu0 0.0
  %384 = vmatprep.subr.mxu0 0.0
  %385 = vmatpush1.msra.mxu0 0.0
  %386 = vmatprep.subr.mxu0 0.0
  %387 = vmatpush1.msra.mxu0 0.0
  %388 = vmatprep.subr.mxu0 0.0
  %389 = vmatpush1.msra.mxu0 0.0
  %390 = vmatprep.subr.mxu0 0.0
  %391 = vmatpush1.msra.mxu0 0.0
  %392 = vmatprep.subr.mxu0 0.0
  %393 = vmatpush1.msra.mxu0 0.0
  %394 = vmatprep.subr.mxu0 0.0
  %395 = vmatpush1.msra.mxu0 0.0
  %396 = vmatprep.subr.mxu0 0.0
  %397 = vmatpush1.msra.mxu0 0.0
  %398 = vmatprep.subr.mxu0 0.0
  %399 = vmatpush1.msra.mxu0 0.0
  %400 = vmatprep.subr.mxu0 0.0
  %401 = vmatpush1.msra.mxu0 0.0
  %402 = vmatprep.subr.mxu0 0.0
  %403 = vmatpush1.msra.mxu0 0.0
  %404 = vmatprep.subr.mxu0 0.0
  %405 = vmatpush1.msra.mxu0 0.0
  %406 = vmatprep.subr.mxu0 0.0
  %407 = vmatpush1.msra.mxu0 %v371
  %408 = vmatprep.subr.mxu0 0.0
  %409 = vmatpush2.msra.mxu0 0.0
  %410 = vmatprep.subr.mxu0 0.0
  %411 = vmatpush2.msra.mxu0 0.0
  %412 = vmatprep.subr.mxu0 0.0
  %413 = vmatpush2.msra.mxu0 0.0
  %414 = vmatprep.subr.mxu0 0.0
  %415 = vmatpush2.msra.mxu0 0.0
  %416 = vmatprep.subr.mxu0 0.0
  %417 = vmatpush2.msra.mxu0 0.0
  %418 = vmatprep.subr.mxu0 0.0
  %419 = vmatpush2.msra.mxu0 0.0
  %420 = vmatprep.subr.mxu0 0.0
  %421 = vmatpush2.msra.mxu0 0.0
  %422 = vmatprep.subr.mxu0 0.0
  %423 = vmatpush2.msra.mxu0 0.0
  %424 = vmatprep.subr.mxu0 0.0
  %425 = vmatpush2.msra.mxu0 0.0
  %426 = vmatprep.subr.mxu0 0.0
  %427 = vmatpush2.msra.mxu0 0.0
  %428 = vmatprep.subr.mxu0 0.0
  %429 = vmatpush2.msra.mxu0 0.0
  %430 = vmatprep.subr.mxu0 0.0
  %431 = vmatpush2.msra.mxu0 0.0
  %432 = vmatprep.subr.mxu0 0.0
  %433 = vmatpush2.msra.mxu0 0.0
  %434 = vmatprep.subr.mxu0 0.0
  %435 = vmatpush2.msra.mxu0 0.0
  %436 = vmatprep.subr.mxu0 0.0
  %437 = vmatpush2.msra.mxu0 0.0
  %438 = vmatprep.subr.mxu0 0.0
  %439 = vmatpush2.msra.mxu0 0.0
  %440 = vmatprep.mubr.f32.mxu0 0.0
  %441 = vmatmul.mubr.f32.gmra.mxu0 %v374
  %v442 = vpop.f32.mrf.mxu0
  %v443 = vadd.f32 0.0, %v442
  %v444 = vpop.f32.mrf.mxu0
  %445 = vdwg.mxu0
  %v446 = vld [vmem:[%s2] sm:$0x7]
  %v447 = vld [vmem:[%s3] sm:$0x1]
  %v449 = vlaneseq
  %v450 = vshrl.u32 %v449, 7
  %v451 = vsub.s32 0, %v450
  %v452 = vrot.slane %v447, %v451
  %v455 = vsel %vm20, %v367, 0
  %v458 = vsel %vm20, %v443, 0
  %v461 = vsel %vm27, %v446, 0
  %463 = vmatprep.subr.mxu0 0.0
  %464 = vmatpush1.msra.mxu0 0.0
  %465 = vmatprep.subr.mxu0 0.0
  %466 = vmatpush1.msra.mxu0 0.0
  %467 = vmatprep.subr.mxu0 0.0
  %468 = vmatpush1.msra.mxu0 0.0
  %469 = vmatprep.subr.mxu0 0.0
  %470 = vmatpush1.msra.mxu0 0.0
  %471 = vmatprep.subr.mxu0 0.0
  %472 = vmatpush1.msra.mxu0 0.0
  %473 = vmatprep.subr.mxu0 0.0
  %474 = vmatpush1.msra.mxu0 0.0
  %475 = vmatprep.subr.mxu0 0.0
  %476 = vmatpush1.msra.mxu0 0.0
  %477 = vmatprep.subr.mxu0 0.0
  %478 = vmatpush1.msra.mxu0 0.0
  %479 = vmatprep.subr.mxu0 0.0
  %480 = vmatpush1.msra.mxu0 0.0
  %481 = vmatprep.subr.mxu0 0.0
  %482 = vmatpush1.msra.mxu0 0.0
  %483 = vmatprep.subr.mxu0 0.0
  %484 = vmatpush1.msra.mxu0 0.0
  %485 = vmatprep.subr.mxu0 0.0
  %486 = vmatpush1.msra.mxu0 0.0
  %487 = vmatprep.subr.mxu0 0.0
  %488 = vmatpush1.msra.mxu0 0.0
  %489 = vmatprep.subr.mxu0 0.0
  %490 = vmatpush1.msra.mxu0 0.0
  %491 = vmatprep.subr.mxu0 0.0
  %492 = vmatpush1.msra.mxu0 0.0
  %493 = vmatprep.subr.mxu0 0.0
  %494 = vmatpush1.msra.mxu0 %v461
  %495 = vmatprep.subr.mxu0 0.0
  %496 = vmatpush2.msra.mxu0 0.0
  %497 = vmatprep.subr.mxu0 0.0
  %498 = vmatpush2.msra.mxu0 0.0
  %499 = vmatprep.subr.mxu0 0.0
  %500 = vmatpush2.msra.mxu0 0.0
  %501 = vmatprep.subr.mxu0 0.0
  %502 = vmatpush2.msra.mxu0 0.0
  %503 = vmatprep.subr.mxu0 0.0
  %504 = vmatpush2.msra.mxu0 0.0
  %505 = vmatprep.subr.mxu0 0.0
  %506 = vmatpush2.msra.mxu0 0.0
  %507 = vmatprep.subr.mxu0 0.0
  %508 = vmatpush2.msra.mxu0 0.0
  %509 = vmatprep.subr.mxu0 0.0
  %510 = vmatpush2.msra.mxu0 0.0
  %511 = vmatprep.subr.mxu0 0.0
  %512 = vmatpush2.msra.mxu0 0.0
  %513 = vmatprep.subr.mxu0 0.0
  %514 = vmatpush2.msra.mxu0 0.0
  %515 = vmatprep.subr.mxu0 0.0
  %516 = vmatpush2.msra.mxu0 0.0
  %517 = vmatprep.subr.mxu0 0.0
  %518 = vmatpush2.msra.mxu0 0.0
  %519 = vmatprep.subr.mxu0 0.0
  %520 = vmatpush2.msra.mxu0 0.0
  %521 = vmatprep.subr.mxu0 0.0
  %522 = vmatpush2.msra.mxu0 0.0
  %523 = vmatprep.subr.mxu0 0.0
  %524 = vmatpush2.msra.mxu0 0.0
  %525 = vmatprep.subr.mxu0 0.0
  %526 = vmatpush2.msra.mxu0 0.0
  %527 = vmatprep.mubr.f32.mxu0 0.0
  %528 = vmatmul.mubr.f32.gmra.mxu0 %v455
  %v529 = vpop.f32.mrf.mxu0
  %v530 = vadd.f32 %v452, %v529
  %v531 = vpop.f32.mrf.mxu0
  %532 = vmatprep.mubr.f32.mxu0 0.0
  %533 = vmatmul.mubr.f32.gmra.mxu0 %v458
  %v534 = vpop.f32.mrf.mxu0
  %v535 = vadd.f32 %v452, %v534
  %v536 = vpop.f32.mrf.mxu0
  %537 = vdwg.mxu0
  %538 = vst.msk [vmem:[%s4] sm:$0xff] %vm20, %v530
  %539 = vst.msk [vmem:[%s4 + $0x8] sm:$0xff] %vm20, %v535
  // Predicated region
  $region18: #{tpu_custom_call.1} parent=0 // pred_check
    _
  $region19: #{tpu_custom_call.1} parent=0 // pred_check_branch
    %541 = sbr.rel (0) target = $region21
  $region20: #{tpu_custom_call.1} parent=0 // pred_region
    _
  $region21: #{tpu_custom_call.1} parent=0 // pred_fallthru
    _
  // Predicated region
  $region22: #{tpu_custom_call.1} parent=0 // pred_check
    _
  $region23: #{tpu_custom_call.1} parent=0 // pred_check_branch
    %543 = sbr.rel (0) target = $region25
  $region24: #{tpu_custom_call.1} parent=0 // pred_region
    _
  $region25: #{tpu_custom_call.1} parent=0 // pred_fallthru
    _

</llo_original>
